<compile_context>
chip_gen: v5e
topology: v5e:2x2
jax: 0.10.0
libtpu: 0.0.40
codegen_flags: <defaults>
</compile_context>

<pallas_src>
import functools

import jax
import jax.numpy as jnp
from jax.experimental import pallas as pl
from jax.experimental.pallas import tpu as pltpu


def _biased_funksvd_kernel(gb_ref, u_ref, v_ref, du_ref, di_ref, o_ref):
    # gb_ref: (1, 1) f32 in SMEM (global bias scalar)
    # u_ref / v_ref: (K, TB) embeddings in VMEM (batch in the lane dim)
    # du_ref / di_ref: (1, TB) f32 per-example biases in VMEM (lane-dense)
    # o_ref: (1, TB) f32 output in VMEM (lane-dense -> unmasked vst)
    u = u_ref[...].astype(jnp.float32)
    v = v_ref[...].astype(jnp.float32)
    # K is in the sublane dim: with K=32 f32 this is 4 full vregs per lane group,
    # so the reduction is a few cheap VALU adds + one intra-vreg sublane reduce.
    dot = jnp.sum(u * v, axis=0, keepdims=True)          # (1, TB) f32
    o_ref[...] = dot + du_ref[...] + di_ref[...] + gb_ref[0, 0]


@functools.partial(jax.jit, static_argnames=("tile_b",))
def biased_funksvd_forward(emb_user, emb_item, dev_user, dev_item, global_bias,
                           user, item, *, tile_b=8192):
    """Pallas implementation of BiasedFunkSvd.forward.

    emb_user: (n_user, K), emb_item: (n_item, K)  (f32 or bf16)
    dev_user: (n_user,), dev_item: (n_item,), global_bias: scalar
    user, item: (B,) integer indices
    returns: (B,) f32
    """
    user = user.astype(jnp.int32)
    item = item.astype(jnp.int32)
    B = user.shape[0]
    K = emb_user.shape[1]

    # Lane-dense tile over the batch: multiple of 128, shrink to fit small B.
    tb = min(int(tile_b), pl.cdiv(B, 128) * 128)
    tb = max(128, (tb // 128) * 128)
    b_pad = pl.cdiv(B, tb) * tb
    pad = b_pad - B

    # Pad indices with 0 (a valid row) so the tail tile never reads garbage.
    user_p = jnp.pad(user, (0, pad))
    item_p = jnp.pad(item, (0, pad))

    # --- glue: gathers in plain JAX, presented lane-dense to the kernel ---
    u_t = emb_user[user_p].T                                    # (K, B_pad)
    v_t = emb_item[item_p].T                                    # (K, B_pad)
    du = dev_user.astype(jnp.float32)[user_p][None, :]          # (1, B_pad)
    di = dev_item.astype(jnp.float32)[item_p][None, :]          # (1, B_pad)
    gb = jnp.reshape(jnp.asarray(global_bias, dtype=jnp.float32), (1, 1))

    grid = (b_pad // tb,)
    out = pl.pallas_call(
        _biased_funksvd_kernel,
        out_shape=jax.ShapeDtypeStruct((1, b_pad), jnp.float32),
        grid_spec=pltpu.PrefetchScalarGridSpec(
            num_scalar_prefetch=0,
            grid=grid,
            in_specs=[
                pl.BlockSpec(memory_space=pltpu.MemorySpace.SMEM),  # global bias
                pl.BlockSpec((K, tb), lambda i: (0, i)),            # user emb (K, TB)
                pl.BlockSpec((K, tb), lambda i: (0, i)),            # item emb (K, TB)
                pl.BlockSpec((1, tb), lambda i: (0, i)),            # dev_user (1, TB)
                pl.BlockSpec((1, tb), lambda i: (0, i)),            # dev_item (1, TB)
            ],
            out_specs=pl.BlockSpec((1, tb), lambda i: (0, i)),
        ),
        compiler_params=pltpu.CompilerParams(
            dimension_semantics=("parallel",),
            vmem_limit_bytes=32 * 1024 * 1024,
        ),
    )(gb, u_t, v_t, du, di)

    return out[0, :B]


if __name__ == "__main__":
    # Small, deterministic setup consistent with the module's __init__ shapes.
    n_user, n_item, k_dim, batch = 16, 24, 32, 8

    key = jax.random.PRNGKey(0)
    k1, k2, k3, k4, k5, k6 = jax.random.split(key, 6)

    # NOTE: the PyTorch __init__ uses normal_(std=0) -> all-zero embeddings.
    # We use small random values instead so the dot-product hot path is
    # exercised; forward-pass semantics are unchanged.
    emb_user = jax.random.normal(k1, (n_user, k_dim), dtype=jnp.float32) * 0.1
    emb_item = jax.random.normal(k2, (n_item, k_dim), dtype=jnp.float32) * 0.1
    dev_user = jax.random.normal(k3, (n_user,), dtype=jnp.float32) * 0.5
    dev_item = jax.random.normal(k4, (n_item,), dtype=jnp.float32) * 0.5
    global_bias = jnp.float32(3.5)

    user = jax.random.randint(k5, (batch,), 0, n_user, dtype=jnp.int32)
    item = jax.random.randint(k6, (batch,), 0, n_item, dtype=jnp.int32)

    out = biased_funksvd_forward(emb_user, emb_item, dev_user, dev_item,
                                 global_bias, user, item)
    out = jax.block_until_ready(out)

    # Pure-JAX reference for correctness.
    ref = ((emb_user[user] * emb_item[item]).sum(axis=1)
           + dev_user[user] + dev_item[item] + global_bias)

    assert out.shape == (batch,), out.shape
    assert jnp.allclose(out, ref, atol=1e-5, rtol=1e-5), (out, ref)
    print("KERNEL_OK")
</pallas_src>

<mosaic_0001>
module attributes {stable_mosaic.version = 11 : i64} {
  func.func @_biased_funksvd_kernel(%arg0: i32, %arg1: memref<1x1xf32, #tpu.memory_space<smem>>, %arg2: memref<32x128xf32, #tpu.memory_space<vmem>>, %arg3: memref<32x128xf32, #tpu.memory_space<vmem>>, %arg4: memref<1x128xf32, #tpu.memory_space<vmem>>, %arg5: memref<1x128xf32, #tpu.memory_space<vmem>>, %arg6: memref<1x128xf32, #tpu.memory_space<vmem>>) attributes {dimension_semantics = [#tpu.dimension_semantics<parallel>], iteration_bounds = array<i64: 1>, scalar_prefetch = 0 : i64, scratch_operands = 0 : i64, tpu.core_type = #tpu.core_type<tc>, window_params = [{transform_indices = @transform_0, window_bounds = array<i64: 1, 1>}, {transform_indices = @transform_1, window_bounds = array<i64: 32, 128>}, {transform_indices = @transform_2, window_bounds = array<i64: 32, 128>}, {transform_indices = @transform_3, window_bounds = array<i64: 1, 128>}, {transform_indices = @transform_4, window_bounds = array<i64: 1, 128>}, {transform_indices = @transform_5, window_bounds = array<i64: 1, 128>}]} {
    %c0 = arith.constant 0 : index
    %c0_0 = arith.constant 0 : index
    %0 = vector.load %arg2[%c0, %c0_0] : memref<32x128xf32, #tpu.memory_space<vmem>>, vector<32x128xf32>
    %c0_1 = arith.constant 0 : index
    %c0_2 = arith.constant 0 : index
    %1 = vector.load %arg3[%c0_1, %c0_2] : memref<32x128xf32, #tpu.memory_space<vmem>>, vector<32x128xf32>
    %2 = arith.mulf %0, %1 : vector<32x128xf32>
    %cst = arith.constant dense<0.000000e+00> : vector<128xf32>
    %3 = vector.multi_reduction <add>, %2, %cst [0] : vector<32x128xf32> to vector<128xf32>
    %4 = vector.shape_cast %3 : vector<128xf32> to vector<1x128xf32>
    %c0_3 = arith.constant 0 : index
    %c0_4 = arith.constant 0 : index
    %5 = vector.load %arg4[%c0_3, %c0_4] : memref<1x128xf32, #tpu.memory_space<vmem>>, vector<1x128xf32>
    %6 = arith.addf %4, %5 : vector<1x128xf32>
    %c0_5 = arith.constant 0 : index
    %c0_6 = arith.constant 0 : index
    %7 = vector.load %arg5[%c0_5, %c0_6] : memref<1x128xf32, #tpu.memory_space<vmem>>, vector<1x128xf32>
    %8 = arith.addf %6, %7 : vector<1x128xf32>
    %c0_7 = arith.constant 0 : index
    %c0_8 = arith.constant 0 : index
    %9 = memref.load %arg1[%c0_7, %c0_8] : memref<1x1xf32, #tpu.memory_space<smem>>
    %10 = vector.broadcast %9 : f32 to vector<1x128xf32>
    %11 = arith.addf %8, %10 : vector<1x128xf32>
    %c0_9 = arith.constant 0 : index
    %c0_10 = arith.constant 0 : index
    %12 = vector.load %arg6[%c0_9, %c0_10] : memref<1x128xf32, #tpu.memory_space<vmem>>, vector<1x128xf32>
    tpu.vector_store %arg6[%c0_9, %c0_10], %11 {strides = array<i32>} : memref<1x128xf32, #tpu.memory_space<vmem>>, vector<1x128xf32>,
    return
  }
  func.func @transform_0(%arg0: i32) -> (i32, i32) {
    %c0_i32 = arith.constant 0 : i32
    %c0_i32_0 = arith.constant 0 : i32
    %c0_i32_1 = arith.constant 0 : i32
    return %c0_i32, %c0_i32_0 : i32, i32
  }
  func.func @transform_1(%arg0: i32) -> (i32, i32) {
    %c0_i32 = arith.constant 0 : i32
    %c0_i32_0 = arith.constant 0 : i32
    return %c0_i32, %arg0 : i32, i32
  }
  func.func @transform_2(%arg0: i32) -> (i32, i32) {
    %c0_i32 = arith.constant 0 : i32
    %c0_i32_0 = arith.constant 0 : i32
    return %c0_i32, %arg0 : i32, i32
  }
  func.func @transform_3(%arg0: i32) -> (i32, i32) {
    %c0_i32 = arith.constant 0 : i32
    %c0_i32_0 = arith.constant 0 : i32
    return %c0_i32, %arg0 : i32, i32
  }
  func.func @transform_4(%arg0: i32) -> (i32, i32) {
    %c0_i32 = arith.constant 0 : i32
    %c0_i32_0 = arith.constant 0 : i32
    return %c0_i32, %arg0 : i32, i32
  }
  func.func @transform_5(%arg0: i32) -> (i32, i32) {
    %c0_i32 = arith.constant 0 : i32
    %c0_i32_0 = arith.constant 0 : i32
    return %c0_i32, %arg0 : i32, i32
  }
}

</mosaic_0001>

<llo_original>
// kernel: biased_funksvd_forward.1
$region0: #{biased_funksvd_forward.1}
  #allocation0 [shape = 'u32[]', space=smem, size = 0x4, offset = 0x4, fixed_abs, tag = 'smem constant byte address 0x4 - core index']
  #allocation1 [shape = 'u32[72,128]{1,0:T(1,128)}', space=vmem, size = 0x9000, scoped, tag = 'internal scratch']
  #allocation2 [shape = 'f32[1,1]{1,0:T(1,128)S(6)}', space=smem, size = 0x200, scoped, tag = 'scoped memory for biased_funksvd_forward.1']
  %s0 = inlined_call_operand.<no memory space> [shape: f32[1,1], index: 0, kind: input, shape index: {}]
  %s1 = inlined_call_operand.vmem [shape: f32[32,128], index: 1, kind: input, shape index: {}]
  %s2 = inlined_call_operand.vmem [shape: f32[32,128], index: 2, kind: input, shape index: {}]
  %s3 = inlined_call_operand.vmem [shape: f32[1,128], index: 3, kind: input, shape index: {}]
  %s4 = inlined_call_operand.vmem [shape: f32[1,128], index: 4, kind: input, shape index: {}]
  %s5 = inlined_call_operand.vmem [shape: f32[1,128], index: 5, kind: output, shape index: {}]
  %s6 = sld [smem:[#allocation0]]
  $region30: #{biased_funksvd_forward.1} parent=0
    _
  %s8 = ssub.s32 1, %s6
  %s9 = scalar_select 0, %s8, %s6
  %10 = sst [smem:[#allocation2]] %s0
  // Predicated region
  $region2: #{biased_funksvd_forward.1} parent=0 // pred_check
    _
  $region3: #{biased_funksvd_forward.1} parent=0 // pred_check_branch
    %12 = sbr.rel (0) target = $region5
  $region4: #{biased_funksvd_forward.1} parent=0 // pred_region
    _
  $region5: #{biased_funksvd_forward.1} parent=0 // pred_fallthru
    _
  // Predicated region
  $region6: #{biased_funksvd_forward.1} parent=0 // pred_check
    _
  $region7: #{biased_funksvd_forward.1} parent=0 // pred_check_branch
    %14 = sbr.rel (0) target = $region9
  $region8: #{biased_funksvd_forward.1} parent=0 // pred_region
    _
  $region9: #{biased_funksvd_forward.1} parent=0 // pred_fallthru
    _
  // Predicated region
  $region10: #{biased_funksvd_forward.1} parent=0 // pred_check
    _
  $region11: #{biased_funksvd_forward.1} parent=0 // pred_check_branch
    %16 = sbr.rel (0) target = $region13
  $region12: #{biased_funksvd_forward.1} parent=0 // pred_region
    _
  $region13: #{biased_funksvd_forward.1} parent=0 // pred_fallthru
    _
  // Predicated region
  $region14: #{biased_funksvd_forward.1} parent=0 // pred_check
    _
  $region15: #{biased_funksvd_forward.1} parent=0 // pred_check_branch
    %18 = sbr.rel (0) target = $region17
  $region16: #{biased_funksvd_forward.1} parent=0 // pred_region
    _
  $region17: #{biased_funksvd_forward.1} parent=0 // pred_fallthru
    _
  // Predicated region
  $region18: #{biased_funksvd_forward.1} parent=0 // pred_check
    _
  $region19: #{biased_funksvd_forward.1} parent=0 // pred_check_branch
    %20 = sbr.rel (0) target = $region21
  $region20: #{biased_funksvd_forward.1} parent=0 // pred_region
    _
  $region21: #{biased_funksvd_forward.1} parent=0 // pred_fallthru
    _
  %v21 = vld [vmem:[%s1] sm:$0xff]
  %v22 = vld [vmem:[%s1 + $0x8] sm:$0xff]
  %v23 = vld [vmem:[%s1 + $0x10] sm:$0xff]
  %v24 = vld [vmem:[%s1 + $0x18] sm:$0xff]
  %v25 = vld [vmem:[%s2] sm:$0xff]
  %v26 = vld [vmem:[%s2 + $0x8] sm:$0xff]
  %v27 = vld [vmem:[%s2 + $0x10] sm:$0xff]
  %v28 = vld [vmem:[%s2 + $0x18] sm:$0xff]
  %v29 = vmul.f32 %v21, %v25
  %v30 = vmul.f32 %v22, %v26
  %v31 = vmul.f32 %v23, %v27
  %v32 = vmul.f32 %v24, %v28
  %v33 = vadd.f32 %v29, %v30
  %v34 = vadd.f32 %v33, %v31
  %v35 = vadd.f32 %v34, %v32
  %v36 = vrot.slane %v35, 4
  %v37 = vadd.f32 %v35, %v36
  %v38 = vrot.slane %v37, 2
  %v39 = vadd.f32 %v37, %v38
  %v40 = vrot.slane %v39, 1
  %v41 = vadd.f32 %v39, %v40
  %v42 = vld [vmem:[%s3] sm:$0x1]
  %v43 = vadd.f32 %v41, %v42
  %v44 = vld [vmem:[%s4] sm:$0x1]
  %v45 = vadd.f32 %v43, %v44
  %s46 = sld [smem:[#allocation2]]
  %v47 = vstv %s46
  %v48 = vadd.f32 %v45, %v47
  %49 = vst [vmem:[%s5] sm:$0x1] %v48
  // Predicated region
  $region22: #{biased_funksvd_forward.1} parent=0 // pred_check
    _
  $region23: #{biased_funksvd_forward.1} parent=0 // pred_check_branch
    %51 = sbr.rel (0) target = $region25
  $region24: #{biased_funksvd_forward.1} parent=0 // pred_region
    _
  $region25: #{biased_funksvd_forward.1} parent=0 // pred_fallthru
    _
  // Predicated region
  $region26: #{biased_funksvd_forward.1} parent=0 // pred_check
    _
  $region27: #{biased_funksvd_forward.1} parent=0 // pred_check_branch
    %53 = sbr.rel (0) target = $region29
  $region28: #{biased_funksvd_forward.1} parent=0 // pred_region
    _
  $region29: #{biased_funksvd_forward.1} parent=0 // pred_fallthru
    _

</llo_original>
